<compile_context>
chip_gen: v5e
topology: v5e:2x2
jax: 0.10.0
libtpu: 0.0.40
codegen_flags: <defaults>
</compile_context>

<pallas_src>
import jax
import jax.numpy as jnp
from jax.experimental import pallas as pl
from jax.experimental.pallas import tpu as pltpu

NINPUT = 8
LAYER_SIZES = [(NINPUT, 16), (16, 16), (16, 12), (12, 8), (8, 1)]
NUM_LAYERS = len(LAYER_SIZES)
FEAT_PAD = 16  # max(in/out features), common padded feature width


def _mlp_kernel(x_ref, w_ref, b_ref, o_ref):
    """Fused forward: x_ref is X^T [FEAT_PAD, block_b]; w_ref [L,16,16] holds
    transposed, zero-padded weights; b_ref [L,16,1]; o_ref [1, block_b]."""
    h = x_ref[...]  # f32 [FEAT_PAD, block_b], batch on lanes

    # 4 hidden layers: h <- relu(W_l^T @ h + b_l), fully unrolled (static).
    for l in range(NUM_LAYERS - 1):
        w = w_ref[l]          # [FEAT_PAD, FEAT_PAD]
        b = b_ref[l]          # [FEAT_PAD, 1] -> broadcasts along lanes
        h = jnp.maximum(
            jnp.dot(w, h, preferred_element_type=jnp.float32) + b, 0.0)

    # Final layer: single output row, no activation. Lane-dense [1, block_b].
    w_last = w_ref[NUM_LAYERS - 1][:1, :]   # [1, FEAT_PAD]
    b_last = b_ref[NUM_LAYERS - 1][:1, :]   # [1, 1]
    y = jnp.dot(w_last, h, preferred_element_type=jnp.float32) + b_last
    o_ref[...] = y.astype(o_ref.dtype)


def _pack_params(params):
    """Transpose + zero-pad all layer weights/biases into two stacked arrays."""
    w_stack = jnp.zeros((NUM_LAYERS, FEAT_PAD, FEAT_PAD), dtype=jnp.float32)
    b_stack = jnp.zeros((NUM_LAYERS, FEAT_PAD, 1), dtype=jnp.float32)
    for l, (w, b) in enumerate(params):
        fan_in, fan_out = w.shape
        w_stack = w_stack.at[l, :fan_out, :fan_in].set(w.T)
        b_stack = b_stack.at[l, :fan_out, 0].set(b.reshape(-1))
    return w_stack, b_stack


def regressor_forward(x, params, *, block_b=512):
    """x: [B, NINPUT] float32.  params: list of (W [in,out], b [out] or [1,out])."""
    B, nin = x.shape
    assert nin == NINPUT
    assert block_b % 128 == 0, "block_b must be lane-aligned (multiple of 128)"

    w_stack, b_stack = _pack_params(params)

    # Pad batch to a multiple of block_b and transpose so batch sits on lanes.
    n_blocks = pl.cdiv(B, block_b)
    b_pad = n_blocks * block_b
    x_t = jnp.zeros((FEAT_PAD, b_pad), dtype=jnp.float32)
    x_t = x_t.at[:NINPUT, :B].set(x.T)

    out = pl.pallas_call(
        _mlp_kernel,
        out_shape=jax.ShapeDtypeStruct((1, b_pad), jnp.float32),
        grid=(n_blocks,),
        in_specs=[
            # X^T tile: full (padded) feature dim on sublanes, batch on lanes.
            pl.BlockSpec((FEAT_PAD, block_b), lambda i: (0, i)),
            # Stacked weights / biases: constant index_map -> VMEM-resident.
            pl.BlockSpec((NUM_LAYERS, FEAT_PAD, FEAT_PAD), lambda i: (0, 0, 0)),
            pl.BlockSpec((NUM_LAYERS, FEAT_PAD, 1), lambda i: (0, 0, 0)),
        ],
        out_specs=pl.BlockSpec((1, block_b), lambda i: (0, i)),
        compiler_params=pltpu.CompilerParams(
            dimension_semantics=("parallel",)),
    )(x_t, w_stack, b_stack)

    # Strip batch padding, return [B, 1] like the PyTorch module.
    return out[0, :B].reshape(B, 1)


def init_params(key, std=0.01):
    """Match RegressorModule._initialize_weights: W ~ N(0, std), b = 0."""
    params = []
    for (fan_in, fan_out) in LAYER_SIZES:
        key, sub = jax.random.split(key)
        w = std * jax.random.normal(sub, (fan_in, fan_out), dtype=jnp.float32)
        b = jnp.zeros((fan_out,), dtype=jnp.float32)
        params.append((w, b))
    return params


def reference_forward(x, params):
    h = x
    for i, (w, b) in enumerate(params):
        h = h @ w + b.reshape(1, -1)
        if i < len(params) - 1:
            h = jnp.maximum(h, 0.0)
    return h


if __name__ == "__main__":
    key = jax.random.PRNGKey(0)
    pkey, xkey, pkey2 = jax.random.split(key, 3)

    B = 200  # not a multiple of block_b -> exercises the padding path
    x = jax.random.normal(xkey, (B, NINPUT), dtype=jnp.float32)

    # 1) Module-faithful init (N(0, 0.01), b=0).
    params = init_params(pkey)
    out = jax.block_until_ready(regressor_forward(x, params, block_b=128))
    ref = reference_forward(x, params)
    assert out.shape == (B, 1)
    assert jnp.allclose(out, ref, atol=1e-5, rtol=1e-5), "mismatch vs reference"

    # 2) Larger-magnitude weights so the numerical check is non-trivial.
    params_big = init_params(pkey2, std=0.5)
    out2 = jax.block_until_ready(regressor_forward(x, params_big, block_b=128))
    ref2 = reference_forward(x, params_big)
    assert jnp.allclose(out2, ref2, atol=1e-5, rtol=1e-5), "mismatch (std=0.5)"

    print("KERNEL_OK")
</pallas_src>

<mosaic_0001>
module attributes {stable_mosaic.version = 11 : i64} {
  func.func @_mlp_kernel(%arg0: i32, %arg1: memref<16x128xf32, #tpu.memory_space<vmem>>, %arg2: memref<5x16x16xf32, #tpu.memory_space<vmem>>, %arg3: memref<5x16x1xf32, #tpu.memory_space<vmem>>, %arg4: memref<1x128xf32, #tpu.memory_space<vmem>>) attributes {dimension_semantics = [#tpu.dimension_semantics<parallel>], iteration_bounds = array<i64: 2>, scalar_prefetch = 0 : i64, scratch_operands = 0 : i64, tpu.core_type = #tpu.core_type<tc>, window_params = [{transform_indices = @transform_0, window_bounds = array<i64: 16, 128>}, {pipeline_mode = #tpu.pipeline_mode<synchronous>, transform_indices = @transform_1, window_bounds = array<i64: 5, 16, 16>}, {pipeline_mode = #tpu.pipeline_mode<synchronous>, transform_indices = @transform_2, window_bounds = array<i64: 5, 16, 1>}, {transform_indices = @transform_3, window_bounds = array<i64: 1, 128>}]} {
    %c0 = arith.constant 0 : index
    %c0_0 = arith.constant 0 : index
    %0 = vector.load %arg1[%c0, %c0_0] : memref<16x128xf32, #tpu.memory_space<vmem>>, vector<16x128xf32>
    %c0_1 = arith.constant 0 : index
    %c0_2 = arith.constant 0 : index
    %c0_3 = arith.constant 0 : index
    %1 = vector.load %arg2[%c0_1, %c0_2, %c0_3] : memref<5x16x16xf32, #tpu.memory_space<vmem>>, vector<1x16x16xf32>
    %2 = vector.shape_cast %1 : vector<1x16x16xf32> to vector<16x16xf32>
    %c0_4 = arith.constant 0 : index
    %c0_5 = arith.constant 0 : index
    %c0_6 = arith.constant 0 : index
    %3 = vector.load %arg3[%c0_4, %c0_5, %c0_6] : memref<5x16x1xf32, #tpu.memory_space<vmem>>, vector<1x16x1xf32>
    %4 = vector.shape_cast %3 : vector<1x16x1xf32> to vector<16x1xf32>
    %cst = arith.constant dense<0.000000e+00> : vector<16x128xf32>
    %5 = tpu.matmul %2, %0, %cst {dimension_numbers = #tpu.dot_dimension_numbers<[1], [0], [0], [1], [0, 0, 1, 1], [], []>} : vector<16x16xf32>, vector<16x128xf32>, vector<16x128xf32> -> vector<16x128xf32>
    %6 = vector.broadcast %4 : vector<16x1xf32> to vector<16x128xf32>
    %7 = arith.addf %5, %6 : vector<16x128xf32>
    %cst_7 = arith.constant 0.000000e+00 : f32
    %8 = vector.broadcast %cst_7 : f32 to vector<16x128xf32>
    %9 = arith.maximumf %7, %8 : vector<16x128xf32>
    %c1 = arith.constant 1 : index
    %c0_8 = arith.constant 0 : index
    %c0_9 = arith.constant 0 : index
    %10 = vector.load %arg2[%c1, %c0_8, %c0_9] : memref<5x16x16xf32, #tpu.memory_space<vmem>>, vector<1x16x16xf32>
    %11 = vector.shape_cast %10 : vector<1x16x16xf32> to vector<16x16xf32>
    %c1_10 = arith.constant 1 : index
    %c0_11 = arith.constant 0 : index
    %c0_12 = arith.constant 0 : index
    %12 = vector.load %arg3[%c1_10, %c0_11, %c0_12] : memref<5x16x1xf32, #tpu.memory_space<vmem>>, vector<1x16x1xf32>
    %13 = vector.shape_cast %12 : vector<1x16x1xf32> to vector<16x1xf32>
    %cst_13 = arith.constant dense<0.000000e+00> : vector<16x128xf32>
    %14 = tpu.matmul %11, %9, %cst_13 {dimension_numbers = #tpu.dot_dimension_numbers<[1], [0], [0], [1], [0, 0, 1, 1], [], []>} : vector<16x16xf32>, vector<16x128xf32>, vector<16x128xf32> -> vector<16x128xf32>
    %15 = vector.broadcast %13 : vector<16x1xf32> to vector<16x128xf32>
    %16 = arith.addf %14, %15 : vector<16x128xf32>
    %cst_14 = arith.constant 0.000000e+00 : f32
    %17 = vector.broadcast %cst_14 : f32 to vector<16x128xf32>
    %18 = arith.maximumf %16, %17 : vector<16x128xf32>
    %c2 = arith.constant 2 : index
    %c0_15 = arith.constant 0 : index
    %c0_16 = arith.constant 0 : index
    %19 = vector.load %arg2[%c2, %c0_15, %c0_16] : memref<5x16x16xf32, #tpu.memory_space<vmem>>, vector<1x16x16xf32>
    %20 = vector.shape_cast %19 : vector<1x16x16xf32> to vector<16x16xf32>
    %c2_17 = arith.constant 2 : index
    %c0_18 = arith.constant 0 : index
    %c0_19 = arith.constant 0 : index
    %21 = vector.load %arg3[%c2_17, %c0_18, %c0_19] : memref<5x16x1xf32, #tpu.memory_space<vmem>>, vector<1x16x1xf32>
    %22 = vector.shape_cast %21 : vector<1x16x1xf32> to vector<16x1xf32>
    %cst_20 = arith.constant dense<0.000000e+00> : vector<16x128xf32>
    %23 = tpu.matmul %20, %18, %cst_20 {dimension_numbers = #tpu.dot_dimension_numbers<[1], [0], [0], [1], [0, 0, 1, 1], [], []>} : vector<16x16xf32>, vector<16x128xf32>, vector<16x128xf32> -> vector<16x128xf32>
    %24 = vector.broadcast %22 : vector<16x1xf32> to vector<16x128xf32>
    %25 = arith.addf %23, %24 : vector<16x128xf32>
    %cst_21 = arith.constant 0.000000e+00 : f32
    %26 = vector.broadcast %cst_21 : f32 to vector<16x128xf32>
    %27 = arith.maximumf %25, %26 : vector<16x128xf32>
    %c3 = arith.constant 3 : index
    %c0_22 = arith.constant 0 : index
    %c0_23 = arith.constant 0 : index
    %28 = vector.load %arg2[%c3, %c0_22, %c0_23] : memref<5x16x16xf32, #tpu.memory_space<vmem>>, vector<1x16x16xf32>
    %29 = vector.shape_cast %28 : vector<1x16x16xf32> to vector<16x16xf32>
    %c3_24 = arith.constant 3 : index
    %c0_25 = arith.constant 0 : index
    %c0_26 = arith.constant 0 : index
    %30 = vector.load %arg3[%c3_24, %c0_25, %c0_26] : memref<5x16x1xf32, #tpu.memory_space<vmem>>, vector<1x16x1xf32>
    %31 = vector.shape_cast %30 : vector<1x16x1xf32> to vector<16x1xf32>
    %cst_27 = arith.constant dense<0.000000e+00> : vector<16x128xf32>
    %32 = tpu.matmul %29, %27, %cst_27 {dimension_numbers = #tpu.dot_dimension_numbers<[1], [0], [0], [1], [0, 0, 1, 1], [], []>} : vector<16x16xf32>, vector<16x128xf32>, vector<16x128xf32> -> vector<16x128xf32>
    %33 = vector.broadcast %31 : vector<16x1xf32> to vector<16x128xf32>
    %34 = arith.addf %32, %33 : vector<16x128xf32>
    %cst_28 = arith.constant 0.000000e+00 : f32
    %35 = vector.broadcast %cst_28 : f32 to vector<16x128xf32>
    %36 = arith.maximumf %34, %35 : vector<16x128xf32>
    %c4 = arith.constant 4 : index
    %c0_29 = arith.constant 0 : index
    %c0_30 = arith.constant 0 : index
    %37 = vector.load %arg2[%c4, %c0_29, %c0_30] : memref<5x16x16xf32, #tpu.memory_space<vmem>>, vector<1x16x16xf32>
    %38 = vector.shape_cast %37 : vector<1x16x16xf32> to vector<16x16xf32>
    %39 = vector.extract_strided_slice %38 {offsets = [0, 0], sizes = [1, 16], strides = [1, 1]} : vector<16x16xf32> to vector<1x16xf32>
    %c4_31 = arith.constant 4 : index
    %c0_32 = arith.constant 0 : index
    %c0_33 = arith.constant 0 : index
    %40 = vector.load %arg3[%c4_31, %c0_32, %c0_33] : memref<5x16x1xf32, #tpu.memory_space<vmem>>, vector<1x16x1xf32>
    %41 = vector.shape_cast %40 : vector<1x16x1xf32> to vector<16x1xf32>
    %42 = vector.extract_strided_slice %41 {offsets = [0, 0], sizes = [1, 1], strides = [1, 1]} : vector<16x1xf32> to vector<1x1xf32>
    %cst_34 = arith.constant dense<0.000000e+00> : vector<1x128xf32>
    %43 = tpu.matmul %39, %36, %cst_34 {dimension_numbers = #tpu.dot_dimension_numbers<[1], [0], [0], [1], [0, 0, 1, 1], [], []>} : vector<1x16xf32>, vector<16x128xf32>, vector<1x128xf32> -> vector<1x128xf32>
    %44 = vector.broadcast %42 : vector<1x1xf32> to vector<1x128xf32>
    %45 = arith.addf %43, %44 : vector<1x128xf32>
    %c0_35 = arith.constant 0 : index
    %c0_36 = arith.constant 0 : index
    %46 = vector.load %arg4[%c0_35, %c0_36] : memref<1x128xf32, #tpu.memory_space<vmem>>, vector<1x128xf32>
    tpu.vector_store %arg4[%c0_35, %c0_36], %45 {strides = array<i32>} : memref<1x128xf32, #tpu.memory_space<vmem>>, vector<1x128xf32>,
    return
  }
  func.func @transform_0(%arg0: i32) -> (i32, i32) {
    %c0_i32 = arith.constant 0 : i32
    %c0_i32_0 = arith.constant 0 : i32
    return %c0_i32, %arg0 : i32, i32
  }
  func.func @transform_1(%arg0: i32) -> (i32, i32, i32) {
    %c0_i32 = arith.constant 0 : i32
    %c0_i32_0 = arith.constant 0 : i32
    %c0_i32_1 = arith.constant 0 : i32
    %c0_i32_2 = arith.constant 0 : i32
    return %c0_i32, %c0_i32_0, %c0_i32_1 : i32, i32, i32
  }
  func.func @transform_2(%arg0: i32) -> (i32, i32, i32) {
    %c0_i32 = arith.constant 0 : i32
    %c0_i32_0 = arith.constant 0 : i32
    %c0_i32_1 = arith.constant 0 : i32
    %c0_i32_2 = arith.constant 0 : i32
    return %c0_i32, %c0_i32_0, %c0_i32_1 : i32, i32, i32
  }
  func.func @transform_3(%arg0: i32) -> (i32, i32) {
    %c0_i32 = arith.constant 0 : i32
    %c0_i32_0 = arith.constant 0 : i32
    return %c0_i32, %arg0 : i32, i32
  }
}

</mosaic_0001>

<llo_original>
// kernel: tpu_custom_call.1
$region0: #{tpu_custom_call.1}
  #allocation0 [shape = 'u32[]', space=smem, size = 0x4, offset = 0x4, fixed_abs, tag = 'smem constant byte address 0x4 - core index']
  #allocation1 [shape = 'u32[72,128]{1,0:T(1,128)}', space=vmem, size = 0x9000, scoped, tag = 'internal scratch']
  %s0 = inlined_call_operand.hbm [shape: f32[16,256], index: 0, kind: input, shape index: {}]
  %s1 = inlined_call_operand.vmem [shape: f32[5,16,16], index: 1, kind: input, shape index: {}]
  %s2 = inlined_call_operand.vmem [shape: f32[5,16,1], index: 2, kind: input, shape index: {}]
  %s3 = inlined_call_operand.hbm [shape: f32[1,256], index: 3, kind: output, shape index: {}]
  %s4 = sld [smem:[#allocation0]]
  $region49: #{tpu_custom_call.1} parent=0
    _
  %s6 = ssub.s32 1, %s4
  %s7 = scalar_select 0, %s6, %s4
  $region1: #{tpu_custom_call.1} parent=0
    #allocation2 [shape = 'u8[16384]{0}', space=vmem, size = 0x4000, scoped, tag = 'input window, operand 0']
    #allocation3 [shape = 's32[2]{0}', space=sflag, size = 0x8, scoped, tag = 'scoped memory for tpu_custom_call.1']
    #allocation4 [shape = 's32[2]{0}', space=sflag, size = 0x8, scoped, tag = 'scoped memory for tpu_custom_call.1']
    #allocation5 [shape = 'u8[1024]{0}', space=vmem, size = 0x400, scoped, tag = 'output window, operand 0']
    %8 = vsyncpa [#allocation3], 0
    %s9 = scalar_lea.sflag [#allocation3], 1
    %10 = vsyncpa %s9, 0
    %11 = vsyncpa [#allocation4], 0
    %s12 = scalar_lea.sflag [#allocation4], 1
    %13 = vsyncpa %s12, 0
    loop: start=0, step=1, limit=4
    $region2: #{tpu_custom_call.1} parent=1 // loop_pre_header
      _
    $region3: #{tpu_custom_call.1} parent=1 // loop_header
      %s15 = sphi 0, %s19
      %p16 = scmp.ge.s32.totalorder %s15, 4
      %s25 = sphi 0, %s27
      %s28 = sphi 0, %s25
      %s29 = sphi 0, %s28
      %s45 = sphi 0, %s29
      %s49 = sphi 0, %s49
      %s51 = sphi 0, %s49
      %s52 = sphi 0, %s51
      %s66 = sphi 0, %s52
      %s70 = sphi 0, %s70
      %s72 = sphi 0, %s70
      %s73 = sphi 0, %s72
      %s87 = sphi 0, %s73
      %s93 = sphi 0, %s95
      %s96 = sphi 0, %s93
      %s97 = sphi 0, %s96
      %s113 = sphi 0, %s97
    $region4: #{tpu_custom_call.1} parent=1 // loop_header_branch
      %18 = sbr.rel (%p16) target = $region8
    $region5: #{tpu_custom_call.1} parent=1 // loop_body
      %s20 = ssub.s32 %s15, 1
      %s21 = ssub.s32 %s15, 2
      %s22 = sadd.s32 %s15, 1
      %s23 = ssub.s32 %s15, %s22
      %p24 = scmp.eq.s32.totalorder %s23, 0
      %s26 = sadd.s32 %s25, 1
      %s27 = scalar_select %p24, %s25, %s26
      %p30 = pneg %p24
      %p31 = scmp.eq.s32.totalorder %s15, 1
      %p32 = por %p30, %p31
      %p33 = scmp.ne.s32.totalorder %s25, %s28
      %p34 = scmp.eq.s32.totalorder %s15, 0
      %p35 = por %p33, %p34
      %p36 = scmp.ne.s32.totalorder %s25, %s28
      %p37 = scmp.eq.s32.totalorder %s20, 1
      %p38 = por %p36, %p37
      %p39 = scmp.ne.s32.totalorder %s28, %s29
      %p40 = scmp.eq.s32.totalorder %s20, 0
      %p41 = por %p39, %p40
      %p42 = scmp.ne.s32.totalorder %s28, %s29
      %p43 = scmp.eq.s32.totalorder %s21, 1
      %p44 = por %p42, %p43
      %p46 = scmp.ne.s32.totalorder %s29, %s45
      %p47 = scmp.eq.s32.totalorder %s21, 0
      %p48 = por %p46, %p47
      %s50 = sadd.s32 %s49, 1
      %p53 = scmp.eq.s32.totalorder %s15, 1
      %p54 = scmp.ne.s32.totalorder %s49, %s51
      %p55 = scmp.eq.s32.totalorder %s15, 0
      %p56 = por %p54, %p55
      %p57 = scmp.ne.s32.totalorder %s49, %s51
      %p58 = scmp.eq.s32.totalorder %s20, 1
      %p59 = por %p57, %p58
      %p60 = scmp.ne.s32.totalorder %s51, %s52
      %p61 = scmp.eq.s32.totalorder %s20, 0
      %p62 = por %p60, %p61
      %p63 = scmp.ne.s32.totalorder %s51, %s52
      %p64 = scmp.eq.s32.totalorder %s21, 1
      %p65 = por %p63, %p64
      %p67 = scmp.ne.s32.totalorder %s52, %s66
      %p68 = scmp.eq.s32.totalorder %s21, 0
      %p69 = por %p67, %p68
      %s71 = sadd.s32 %s70, 1
      %p74 = scmp.eq.s32.totalorder %s15, 1
      %p75 = scmp.ne.s32.totalorder %s70, %s72
      %p76 = scmp.eq.s32.totalorder %s15, 0
      %p77 = por %p75, %p76
      %p78 = scmp.ne.s32.totalorder %s70, %s72
      %p79 = scmp.eq.s32.totalorder %s20, 1
      %p80 = por %p78, %p79
      %p81 = scmp.ne.s32.totalorder %s72, %s73
      %p82 = scmp.eq.s32.totalorder %s20, 0
      %p83 = por %p81, %p82
      %p84 = scmp.ne.s32.totalorder %s72, %s73
      %p85 = scmp.eq.s32.totalorder %s21, 1
      %p86 = por %p84, %p85
      %p88 = scmp.ne.s32.totalorder %s73, %s87
      %p89 = scmp.eq.s32.totalorder %s21, 0
      %p90 = por %p88, %p89
      %s91 = ssub.s32 %s15, %s22
      %p92 = scmp.eq.s32.totalorder %s91, 0
      %s94 = sadd.s32 %s93, 1
      %s95 = scalar_select %p92, %s93, %s94
      %p98 = pneg %p92
      %p99 = scmp.eq.s32.totalorder %s15, 1
      %p100 = por %p98, %p99
      %p101 = scmp.ne.s32.totalorder %s93, %s96
      %p102 = scmp.eq.s32.totalorder %s15, 0
      %p103 = por %p101, %p102
      %p104 = scmp.ne.s32.totalorder %s93, %s96
      %p105 = scmp.eq.s32.totalorder %s20, 1
      %p106 = por %p104, %p105
      %p107 = scmp.ne.s32.totalorder %s96, %s97
      %p108 = scmp.eq.s32.totalorder %s20, 0
      %p109 = por %p107, %p108
      %p110 = scmp.ne.s32.totalorder %s96, %s97
      %p111 = scmp.eq.s32.totalorder %s21, 1
      %p112 = por %p110, %p111
      %p114 = scmp.ne.s32.totalorder %s97, %s113
      %p115 = scmp.eq.s32.totalorder %s21, 0
      %p116 = por %p114, %p115
      %p117 = scmp.le.s32.totalorder 1, %s15
      %p118 = scmp.lt.s32.totalorder %s15, 3
      %p119 = pnand %p117, %p118
      %p120 = pneg %p119
      // Predicated region
      $region9: #{tpu_custom_call.1} parent=5 // pred_check
        _
      $region10: #{tpu_custom_call.1} parent=5 // pred_check_branch
        %122 = sbr.rel (%p119) target = $region12
      $region11: #{tpu_custom_call.1} parent=5 // pred_region
        %s123 = ssub.s32 %s15, 1
        // Predicated region
        $region13: #{tpu_custom_call.1} parent=11 // pred_check
          %p124 = pneg %p62
        $region14: #{tpu_custom_call.1} parent=11 // pred_check_branch
          %126 = sbr.rel (%p124) target = $region16
        $region15: #{tpu_custom_call.1} parent=11 // pred_region
          _
        $region16: #{tpu_custom_call.1} parent=11 // pred_fallthru
          _
        // Predicated region
        $region17: #{tpu_custom_call.1} parent=11 // pred_check
          %p127 = pneg %p83
        $region18: #{tpu_custom_call.1} parent=11 // pred_check_branch
          %129 = sbr.rel (%p127) target = $region20
        $region19: #{tpu_custom_call.1} parent=11 // pred_region
          _
        $region20: #{tpu_custom_call.1} parent=11 // pred_fallthru
          _
      $region12: #{tpu_custom_call.1} parent=5 // pred_fallthru
        _
      %p130 = scmp.lt.s32.totalorder %s15, 2
      // Predicated region
      $region21: #{tpu_custom_call.1} parent=5 // pred_check
        %p131 = pneg %p130
      $region22: #{tpu_custom_call.1} parent=5 // pred_check_branch
        %133 = sbr.rel (%p131) target = $region24
      $region23: #{tpu_custom_call.1} parent=5 // pred_region
        // Predicated region
        $region25: #{tpu_custom_call.1} parent=23 // pred_check
          %p134 = pneg %p35
        $region26: #{tpu_custom_call.1} parent=23 // pred_check_branch
          %136 = sbr.rel (%p134) target = $region28
        $region27: #{tpu_custom_call.1} parent=23 // pred_region
          %s137 = sand.u32 %s25, 1
          %s138 = scalar_lea.sflag [#allocation3], %s137
          %s139 = sand.u32 %s25, 1
          %s140 = smul.addr %s139, 16
          %s141 = scalar_lea.vmem [#allocation2], %s140
          %143 = vsyncadd %s138, 0
          %s144 = smul.addr %s15, 8
          %s145 = scalar_lea.hbm %s0, %s144
          %s146 = sshll.u32 %s145, 4
          %s147 = int_to_ptr.hbm [resolvable:$true] %s146
          %s148 = sshll.u32 %s141, 4
          %s149 = int_to_ptr.vmem [resolvable:$true] %s148
          %154 = dma.hbm_to_vmem [thread:$0]  %s147, 256, %s149, %s138, 256, 128, 8
        $region28: #{tpu_custom_call.1} parent=23 // pred_fallthru
          _
      $region24: #{tpu_custom_call.1} parent=5 // pred_fallthru
        _
      %p155 = scmp.le.s32.totalorder 1, %s15
      %p156 = scmp.lt.s32.totalorder %s15, 3
      %p157 = pnand %p155, %p156
      %p158 = pneg %p157
      // Predicated region
      $region29: #{tpu_custom_call.1} parent=5 // pred_check
        _
      $region30: #{tpu_custom_call.1} parent=5 // pred_check_branch
        %160 = sbr.rel (%p157) target = $region32
      $region31: #{tpu_custom_call.1} parent=5 // pred_region
        %s161 = ssub.s32 %s15, 1
        %s162 = sand.u32 %s28, 1
        %s163 = scalar_lea.sflag [#allocation3], %s162
        %s164 = sand.u32 %s28, 1
        %s165 = smul.addr %s164, 16
        %s166 = scalar_lea.vmem [#allocation2], %s165
        // Predicated region
        $region33: #{tpu_custom_call.1} parent=31 // pred_check
          %p167 = pneg %p41
        $region34: #{tpu_custom_call.1} parent=31 // pred_check_branch
          %169 = sbr.rel (%p167) target = $region36
        $region35: #{tpu_custom_call.1} parent=31 // pred_region
          %171 = dma.done %s163, 256
        $region36: #{tpu_custom_call.1} parent=31 // pred_fallthru
          _
        %s172 = sand.u32 %s28, 1
        %s173 = scalar_lea.sflag [#allocation3], %s172
        %s174 = sand.u32 %s28, 1
        %s175 = smul.addr %s174, 16
        %s176 = scalar_lea.vmem [#allocation2], %s175
        %p177 = pneg %p41
        %p178 = pneg %p38
        %p179 = pneg %p62
        %p180 = pneg %p59
        %p181 = pneg %p83
        %p182 = pneg %p80
        %p183 = pneg %p109
        %p184 = pneg %p106
        %s185 = sand.u32 %s96, 1
        %s186 = scalar_lea.sflag [#allocation4], %s185
        %s187 = sand.u32 %s96, 1
        %s188 = scalar_lea.vmem [#allocation5], %s187
        %v189 = vld [vmem:[%s166] sm:$0xff]
        %v190 = vld [vmem:[%s166 + $0x8] sm:$0xff]
        %v191 = vld [vmem:[%s1] sm:$0xff]
        %v192 = vld [vmem:[%s1 + $0x8] sm:$0xff]
        %v193 = vld [vmem:[%s2] sm:$0xff]
        %v194 = vld [vmem:[%s2 + $0x8] sm:$0xff]
        %196 = vset.pattern.permute.xlu0 0
        %197 = vperm.xlu0 %196, %v193
        %v198 = vpop.permute.xlu0 %197
        %201 = vset.pattern.permute.xlu0 0
        %202 = vperm.xlu0 %201, %v194
        %v203 = vpop.permute.xlu0 %202
        %vm205 = vcmask 130048
        %v207 = vsel %vm205, %v191, 0
        %v210 = vsel %vm205, %v192, 0
        %212 = vmatpush.msra.mxu0 0.0
        %213 = vmatpush.msra.mxu0 0.0
        %214 = vmatpush.msra.mxu0 0.0
        %215 = vmatpush.msra.mxu0 0.0
        %216 = vmatpush.msra.mxu0 0.0
        %217 = vmatpush.msra.mxu0 0.0
        %218 = vmatpush.msra.mxu0 0.0
        %219 = vmatpush.msra.mxu0 0.0
        %220 = vmatpush.msra.mxu0 0.0
        %221 = vmatpush.msra.mxu0 0.0
        %222 = vmatpush.msra.mxu0 0.0
        %223 = vmatpush.msra.mxu0 0.0
        %224 = vmatpush.msra.mxu0 0.0
        %225 = vmatpush.msra.mxu0 0.0
        %226 = vmatpush.msra.mxu0 %v190
        %227 = vmatpush.msra.mxu0 %v189
        %228 = vmatmul.f32.gmra.mxu0 %v207
        %v229 = vpop.f32.mrf.mxu0
        %v230 = vadd.f32 %v198, %v229
        %231 = vmatmul.f32.gmra.mxu0 %v210
        %v232 = vpop.f32.mrf.mxu0
        %v233 = vadd.f32 %v203, %v232
        %234 = vdwg.mxu0
        %v235 = vmax.f32 %v230, 0.0
        %v236 = vmax.f32 %v233, 0.0
        %s237 = scalar_lea.vmem %s1, 16
        %v238 = vld [vmem:[%s237] sm:$0xff]
        %v239 = vld [vmem:[%s237 + $0x8] sm:$0xff]
        %s240 = scalar_lea.vmem %s2, 16
        %v241 = vld [vmem:[%s240] sm:$0xff]
        %v242 = vld [vmem:[%s240 + $0x8] sm:$0xff]
        %244 = vset.pattern.permute.xlu0 0
        %245 = vperm.xlu0 %244, %v241
        %v246 = vpop.permute.xlu0 %245
        %249 = vset.pattern.permute.xlu0 0
        %250 = vperm.xlu0 %249, %v242
        %v251 = vpop.permute.xlu0 %250
        %v254 = vsel %vm205, %v238, 0
        %v257 = vsel %vm205, %v239, 0
        %259 = vmatpush.msra.mxu0 0.0
        %260 = vmatpush.msra.mxu0 0.0
        %261 = vmatpush.msra.mxu0 0.0
        %262 = vmatpush.msra.mxu0 0.0
        %263 = vmatpush.msra.mxu0 0.0
        %264 = vmatpush.msra.mxu0 0.0
        %265 = vmatpush.msra.mxu0 0.0
        %266 = vmatpush.msra.mxu0 0.0
        %267 = vmatpush.msra.mxu0 0.0
        %268 = vmatpush.msra.mxu0 0.0
        %269 = vmatpush.msra.mxu0 0.0
        %270 = vmatpush.msra.mxu0 0.0
        %271 = vmatpush.msra.mxu0 0.0
        %272 = vmatpush.msra.mxu0 0.0
        %273 = vmatpush.msra.mxu0 %v236
        %274 = vmatpush.msra.mxu0 %v235
        %275 = vmatmul.f32.gmra.mxu0 %v254
        %v276 = vpop.f32.mrf.mxu0
        %v277 = vadd.f32 %v246, %v276
        %278 = vmatmul.f32.gmra.mxu0 %v257
        %v279 = vpop.f32.mrf.mxu0
        %v280 = vadd.f32 %v251, %v279
        %281 = vdwg.mxu0
        %v282 = vmax.f32 %v277, 0.0
        %v283 = vmax.f32 %v280, 0.0
        %s284 = scalar_lea.vmem %s1, 32
        %v285 = vld [vmem:[%s284] sm:$0xff]
        %v286 = vld [vmem:[%s284 + $0x8] sm:$0xff]
        %s287 = scalar_lea.vmem %s2, 32
        %v288 = vld [vmem:[%s287] sm:$0xff]
        %v289 = vld [vmem:[%s287 + $0x8] sm:$0xff]
        %291 = vset.pattern.permute.xlu0 0
        %292 = vperm.xlu0 %291, %v288
        %v293 = vpop.permute.xlu0 %292
        %296 = vset.pattern.permute.xlu0 0
        %297 = vperm.xlu0 %296, %v289
        %v298 = vpop.permute.xlu0 %297
        %v301 = vsel %vm205, %v285, 0
        %v304 = vsel %vm205, %v286, 0
        %306 = vmatpush.msra.mxu0 0.0
        %307 = vmatpush.msra.mxu0 0.0
        %308 = vmatpush.msra.mxu0 0.0
        %309 = vmatpush.msra.mxu0 0.0
        %310 = vmatpush.msra.mxu0 0.0
        %311 = vmatpush.msra.mxu0 0.0
        %312 = vmatpush.msra.mxu0 0.0
        %313 = vmatpush.msra.mxu0 0.0
        %314 = vmatpush.msra.mxu0 0.0
        %315 = vmatpush.msra.mxu0 0.0
        %316 = vmatpush.msra.mxu0 0.0
        %317 = vmatpush.msra.mxu0 0.0
        %318 = vmatpush.msra.mxu0 0.0
        %319 = vmatpush.msra.mxu0 0.0
        %320 = vmatpush.msra.mxu0 %v283
        %321 = vmatpush.msra.mxu0 %v282
        %322 = vmatmul.f32.gmra.mxu0 %v301
        %v323 = vpop.f32.mrf.mxu0
        %v324 = vadd.f32 %v293, %v323
        %325 = vmatmul.f32.gmra.mxu0 %v304
        %v326 = vpop.f32.mrf.mxu0
        %v327 = vadd.f32 %v298, %v326
        %328 = vdwg.mxu0
        %v329 = vmax.f32 %v324, 0.0
        %v330 = vmax.f32 %v327, 0.0
        %s331 = scalar_lea.vmem %s1, 48
        %v332 = vld [vmem:[%s331] sm:$0xff]
        %v333 = vld [vmem:[%s331 + $0x8] sm:$0xff]
        %s334 = scalar_lea.vmem %s2, 48
        %v335 = vld [vmem:[%s334] sm:$0xff]
        %v336 = vld [vmem:[%s334 + $0x8] sm:$0xff]
        %338 = vset.pattern.permute.xlu0 0
        %339 = vperm.xlu0 %338, %v335
        %v340 = vpop.permute.xlu0 %339
        %343 = vset.pattern.permute.xlu0 0
        %344 = vperm.xlu0 %343, %v336
        %v345 = vpop.permute.xlu0 %344
        %v348 = vsel %vm205, %v332, 0
        %v351 = vsel %vm205, %v333, 0
        %353 = vmatpush.msra.mxu0 0.0
        %354 = vmatpush.msra.mxu0 0.0
        %355 = vmatpush.msra.mxu0 0.0
        %356 = vmatpush.msra.mxu0 0.0
        %357 = vmatpush.msra.mxu0 0.0
        %358 = vmatpush.msra.mxu0 0.0
        %359 = vmatpush.msra.mxu0 0.0
        %360 = vmatpush.msra.mxu0 0.0
        %361 = vmatpush.msra.mxu0 0.0
        %362 = vmatpush.msra.mxu0 0.0
        %363 = vmatpush.msra.mxu0 0.0
        %364 = vmatpush.msra.mxu0 0.0
        %365 = vmatpush.msra.mxu0 0.0
        %366 = vmatpush.msra.mxu0 0.0
        %367 = vmatpush.msra.mxu0 %v330
        %368 = vmatpush.msra.mxu0 %v329
        %369 = vmatmul.f32.gmra.mxu0 %v348
        %v370 = vpop.f32.mrf.mxu0
        %v371 = vadd.f32 %v340, %v370
        %372 = vmatmul.f32.gmra.mxu0 %v351
        %v373 = vpop.f32.mrf.mxu0
        %v374 = vadd.f32 %v345, %v373
        %375 = vdwg.mxu0
        %v376 = vmax.f32 %v371, 0.0
        %v377 = vmax.f32 %v374, 0.0
        %s378 = scalar_lea.vmem %s1, 64
        %v379 = vld [vmem:[%s378] sm:$0xff]
        %s380 = scalar_lea.vmem %s2, 64
        %v381 = vld [vmem:[%s380] sm:$0xff]
        %383 = vset.pattern.permute.xlu0 0
        %384 = vperm.xlu0 %383, %v381
        %v385 = vpop.permute.xlu0 %384
        %v388 = vsel %vm205, %v379, 0
        %390 = vmatpush.msra.mxu0 0.0
        %391 = vmatpush.msra.mxu0 0.0
        %392 = vmatpush.msra.mxu0 0.0
        %393 = vmatpush.msra.mxu0 0.0
        %394 = vmatpush.msra.mxu0 0.0
        %395 = vmatpush.msra.mxu0 0.0
        %396 = vmatpush.msra.mxu0 0.0
        %397 = vmatpush.msra.mxu0 0.0
        %398 = vmatpush.msra.mxu0 0.0
        %399 = vmatpush.msra.mxu0 0.0
        %400 = vmatpush.msra.mxu0 0.0
        %401 = vmatpush.msra.mxu0 0.0
        %402 = vmatpush.msra.mxu0 0.0
        %403 = vmatpush.msra.mxu0 0.0
        %404 = vmatpush.msra.mxu0 %v377
        %405 = vmatpush.msra.mxu0 %v376
        %406 = vmatmul.f32.gmra.mxu0 %v388
        %v407 = vpop.f32.mrf.mxu0
        %v408 = vadd.f32 %v385, %v407
        %409 = vdwg.mxu0
        %410 = vst [vmem:[%s188] sm:$0x1] %v408
        %s411 = sand.u32 %s96, 1
        %s412 = scalar_lea.sflag [#allocation4], %s411
        %s413 = sand.u32 %s96, 1
        %s414 = scalar_lea.vmem [#allocation5], %s413
        // Predicated region
        $region37: #{tpu_custom_call.1} parent=31 // pred_check
          %p415 = pneg %p106
        $region38: #{tpu_custom_call.1} parent=31 // pred_check_branch
          %417 = sbr.rel (%p415) target = $region40
        $region39: #{tpu_custom_call.1} parent=31 // pred_region
          %419 = vsyncadd %s412, 0
          %s420 = scalar_lea.hbm %s3, %s20
          %s422 = sshll.u32 %s414, 4
          %s423 = int_to_ptr.vmem [resolvable:$true] %s422
          %s424 = sshll.u32 %s420, 4
          %s425 = int_to_ptr.hbm [resolvable:$true] %s424
          %427 = dma.vmem_to_hbm [thread:$0]  %s423, 16, %s425, %s412
        $region40: #{tpu_custom_call.1} parent=31 // pred_fallthru
          _
      $region32: #{tpu_custom_call.1} parent=5 // pred_fallthru
        _
      %p428 = scmp.le.s32.totalorder 2, %s15
      // Predicated region
      $region41: #{tpu_custom_call.1} parent=5 // pred_check
        %p429 = pneg %p428
      $region42: #{tpu_custom_call.1} parent=5 // pred_check_branch
        %431 = sbr.rel (%p429) target = $region44
      $region43: #{tpu_custom_call.1} parent=5 // pred_region
        %s432 = ssub.s32 %s15, 2
        // Predicated region
        $region45: #{tpu_custom_call.1} parent=43 // pred_check
          %p433 = pneg %p112
        $region46: #{tpu_custom_call.1} parent=43 // pred_check_branch
          %435 = sbr.rel (%p433) target = $region48
        $region47: #{tpu_custom_call.1} parent=43 // pred_region
          %s436 = sand.u32 %s97, 1
          %s437 = scalar_lea.sflag [#allocation4], %s436
          %s438 = sand.u32 %s97, 1
          %s439 = scalar_lea.vmem [#allocation5], %s438
          %441 = dma.done %s437, 16
        $region48: #{tpu_custom_call.1} parent=43 // pred_fallthru
          _
      $region44: #{tpu_custom_call.1} parent=5 // pred_fallthru
        _
    $region6: #{tpu_custom_call.1} parent=1 // loop_footer
      %s19 = sadd.s32 1, %s15
    $region7: #{tpu_custom_call.1} parent=1 // loop_footer_branch
      %14 = sbr.rel target = $region3
    $region8: #{tpu_custom_call.1} parent=1 // loop_exit
      _
    %442 = vsyncpa [#allocation3], 1
    %s443 = scalar_lea.sflag [#allocation3], 1
    %444 = vsyncpa %s443, 1
    %445 = vsyncpa [#allocation4], 1
    %s446 = scalar_lea.sflag [#allocation4], 1
    %447 = vsyncpa %s446, 1

</llo_original>
